<compile_context>
chip_gen: v6e
topology: v6e:2x2x1
jax: 0.10.0
libtpu: 0.0.40
codegen_flags: <defaults>
</compile_context>

<pallas_src>
import jax
import jax.numpy as jnp
from jax.experimental import pallas as pl
from jax.experimental.pallas import tpu as pltpu


_LANES = 128   # lane width of the flat view; 4-element groups stay lane-aligned
_GROUP = 4     # (M11, M12, M21, M22) in  /  (s1, s2, s3, s4) out


def _invariant_poly_kernel(x_ref, o_ref):
    """x_ref / o_ref: (rows, 128) blocks of the flat element stream.

    Lane position mod 4 identifies the component within each group:
      input : 0 -> M11 (a), 1 -> M12 (b), 2 -> M21 (c), 3 -> M22 (d)
      output: 0 -> s1,      1 -> s2,      2 -> s3,      3 -> s4
    Rolls are along the 128-lane axis only (per row), and every value actually
    selected never crosses a group boundary, so wrap-around is harmless.
    """
    x = x_ref[...].astype(jnp.float32)
    n = x.shape[-1]  # == 128

    # roll by (-k) % n -> value from lane l+k ; roll by +k -> value from lane l-k
    z = x * x                                       # a^2, b^2, c^2, d^2 per group
    s12 = z + pltpu.roll(z, (-2) % n, axis=1)       # p=0: a^2+c^2 ; p=1: b^2+d^2
    y = x * pltpu.roll(x, (-1) % n, axis=1)         # y[l] = x[l]*x[l+1]: ab, bc, cd, *
    ry = pltpu.roll(y, 2, axis=1)                   # ry[l] = y[l-2]
    s3 = ry + y                                     # p=2: a*b + c*d
    s4 = pltpu.roll(x, 3, axis=1) * x - ry          # p=3: a*d - b*c

    p = jax.lax.broadcasted_iota(jnp.int32, x.shape, 1) % _GROUP
    out = jnp.where(p <= 1, s12, jnp.where(p == 2, s3, s4))
    o_ref[...] = out.astype(o_ref.dtype)


def _choose_block_rows(rows: int, itemsize: int, max_block_rows=None) -> int:
    # ~1 MiB of input bytes per block: amortizes the ~0.35us per-grid-step cost
    # while keeping the double-buffered in/out pipeline buffers plus the block
    # sized f32 temporaries (rolled copies / products) comfortably inside the
    # scoped-VMEM budgets of v5e / v6e / v7x.
    target_bytes = 1 << 20
    blk = max(8, target_bytes // (_LANES * itemsize))
    if max_block_rows is not None:
        blk = max(8, min(blk, max_block_rows))
    blk = min(blk, rows)
    if blk < rows:
        blk -= blk % 8          # tiled blocks must keep 8-sublane alignment
    elif rows > 512:
        # The whole problem fits in one block but is big enough to matter:
        # split into >=2 grid steps so v7x's second TensorCore gets half.
        blk = ((rows + 1) // 2 + 7) // 8 * 8
    return max(blk, 1)


def invariant_poly(M: jax.Array, *, block_rows=None) -> jax.Array:
    """M: [B, 2, 2] float array -> [B, 4] invariants (s1, s2, s3, s4)."""
    assert M.ndim == 3 and M.shape[1] == 2 and M.shape[2] == 2, M.shape
    B = M.shape[0]
    dtype = M.dtype
    if B == 0:
        return jnp.zeros((0, _GROUP), dtype)

    total = B * _GROUP
    itemsize = jnp.dtype(dtype).itemsize

    flat = M.reshape(total)                 # contiguous -> zero-copy view
    rem = total % _LANES
    if rem:
        # Rare ragged case (B % 32 != 0): pad the flat stream to a lane multiple.
        flat = jnp.pad(flat, (0, _LANES - rem))
    rows = flat.shape[0] // _LANES
    x2d = flat.reshape(rows, _LANES)        # still zero-copy

    blk = _choose_block_rows(rows, itemsize, block_rows)
    grid = (pl.cdiv(rows, blk),)

    out2d = pl.pallas_call(
        _invariant_poly_kernel,
        out_shape=jax.ShapeDtypeStruct((rows, _LANES), dtype),
        grid_spec=pltpu.PrefetchScalarGridSpec(
            num_scalar_prefetch=0,
            grid=grid,
            in_specs=[pl.BlockSpec((blk, _LANES), lambda i: (i, 0))],
            out_specs=pl.BlockSpec((blk, _LANES), lambda i: (i, 0)),
        ),
        compiler_params=pltpu.CompilerParams(
            dimension_semantics=("parallel",),
            vmem_limit_bytes=32 * 1024 * 1024,
        ),
        cost_estimate=pl.CostEstimate(
            flops=12 * B,
            transcendentals=0,
            bytes_accessed=2 * total * itemsize,
        ),
    )(x2d)

    out_flat = out2d.reshape(rows * _LANES)
    if rem:
        out_flat = out_flat[:total]
    return out_flat.reshape(B, _GROUP)


def _reference(M: jnp.ndarray) -> jnp.ndarray:
    M11 = M[:, 0, 0]
    M12 = M[:, 0, 1]
    M21 = M[:, 1, 0]
    M22 = M[:, 1, 1]
    s1 = M11 ** 2 + M21 ** 2
    s2 = M12 ** 2 + M22 ** 2
    s3 = M11 * M12 + M21 * M22
    s4 = M11 * M22 - M12 * M21
    return jnp.stack([s1, s2, s3, s4], axis=1)


if __name__ == "__main__":
    key = jax.random.PRNGKey(0)
    fn = jax.jit(invariant_poly, static_argnames=("block_rows",))

    cases = [
        (64, None),    # B % 32 == 0: zero-copy lane-dense path, single block
        (8, None),     # ragged B: padded flat stream
        (1288, 8),     # ragged B + forced tiny blocks: multi-step "parallel"
                       # grid with a clipped boundary block
    ]
    for i, (B, br) in enumerate(cases):
        M = jax.random.normal(jax.random.fold_in(key, i), (B, 2, 2),
                              dtype=jnp.float32)
        out = jax.block_until_ready(fn(M, block_rows=br))
        ref = _reference(M)
        assert out.shape == (B, 4), out.shape
        assert jnp.allclose(out, ref, atol=1e-5, rtol=1e-5), (B, out, ref)

    print("KERNEL_OK")
</pallas_src>

<mosaic_0001>
module attributes {stable_mosaic.version = 11 : i64} {
  func.func @_invariant_poly_kernel(%arg0: i32, %arg1: memref<2x128xf32, #tpu.memory_space<vmem>>, %arg2: memref<2x128xf32, #tpu.memory_space<vmem>>) attributes {dimension_semantics = [#tpu.dimension_semantics<parallel>], iteration_bounds = array<i64: 1>, scalar_prefetch = 0 : i64, scratch_operands = 0 : i64, tpu.core_type = #tpu.core_type<tc>, window_params = [{transform_indices = @transform_0, window_bounds = array<i64: 2, 128>}, {transform_indices = @transform_1, window_bounds = array<i64: 2, 128>}]} {
    %c0 = arith.constant 0 : index
    %c0_0 = arith.constant 0 : index
    %0 = vector.load %arg1[%c0, %c0_0] : memref<2x128xf32, #tpu.memory_space<vmem>>, vector<2x128xf32>
    %1 = arith.mulf %0, %0 : vector<2x128xf32>
    %c126_i32 = arith.constant 126 : i32
    %2 = tpu.dynamic_rotate %1 by %c126_i32 dim 1 : vector<2x128xf32>, i32 -> vector<2x128xf32>
    %3 = arith.addf %1, %2 : vector<2x128xf32>
    %c127_i32 = arith.constant 127 : i32
    %4 = tpu.dynamic_rotate %0 by %c127_i32 dim 1 : vector<2x128xf32>, i32 -> vector<2x128xf32>
    %5 = arith.mulf %0, %4 : vector<2x128xf32>
    %c2_i32 = arith.constant 2 : i32
    %6 = tpu.dynamic_rotate %5 by %c2_i32 dim 1 : vector<2x128xf32>, i32 -> vector<2x128xf32>
    %7 = arith.addf %6, %5 : vector<2x128xf32>
    %c3_i32 = arith.constant 3 : i32
    %8 = tpu.dynamic_rotate %0 by %c3_i32 dim 1 : vector<2x128xf32>, i32 -> vector<2x128xf32>
    %9 = arith.mulf %8, %0 : vector<2x128xf32>
    %10 = arith.subf %9, %6 : vector<2x128xf32>
    %11 = tpu.iota {dimensions = array<i32: 1>} : vector<2x128xi32>
    %c4_i32 = arith.constant 4 : i32
    %c0_i32 = arith.constant 0 : i32
    %12 = arith.cmpi eq, %c4_i32, %c0_i32 : i32
    %c1_i32 = arith.constant 1 : i32
    %13 = arith.select %12, %c1_i32, %c4_i32 : i32
    %14 = vector.broadcast %13 : i32 to vector<2x128xi32>
    %15 = arith.remsi %11, %14 : vector<2x128xi32>
    %c0_i32_1 = arith.constant 0 : i32
    %16 = vector.broadcast %c0_i32_1 : i32 to vector<2x128xi32>
    %17 = arith.cmpi ne, %15, %16 : vector<2x128xi32>
    %c0_i32_2 = arith.constant 0 : i32
    %18 = vector.broadcast %c0_i32_2 : i32 to vector<2x128xi32>
    %19 = arith.cmpi slt, %15, %18 : vector<2x128xi32>
    %c0_i32_3 = arith.constant 0 : i32
    %20 = arith.cmpi slt, %13, %c0_i32_3 : i32
    %21 = vector.broadcast %20 : i1 to vector<2x128xi1>
    %22 = vector.broadcast %21 : vector<2x128xi1> to vector<2x128xi1>
    %23 = arith.xori %19, %22 : vector<2x128xi1>
    %24 = arith.andi %23, %17 : vector<2x128xi1>
    %25 = vector.broadcast %13 : i32 to vector<2x128xi32>
    %26 = arith.addi %15, %25 : vector<2x128xi32>
    %27 = arith.select %24, %26, %15 : vector<2x128xi1>, vector<2x128xi32>
    %c1_i32_4 = arith.constant 1 : i32
    %28 = vector.broadcast %c1_i32_4 : i32 to vector<2x128xi32>
    %29 = arith.cmpi sle, %27, %28 : vector<2x128xi32>
    %c2_i32_5 = arith.constant 2 : i32
    %30 = vector.broadcast %c2_i32_5 : i32 to vector<2x128xi32>
    %31 = arith.cmpi eq, %27, %30 : vector<2x128xi32>
    %32 = arith.select %31, %7, %10 : vector<2x128xi1>, vector<2x128xf32>
    %33 = arith.select %29, %3, %32 : vector<2x128xi1>, vector<2x128xf32>
    %c0_6 = arith.constant 0 : index
    %c0_7 = arith.constant 0 : index
    %34 = vector.load %arg2[%c0_6, %c0_7] : memref<2x128xf32, #tpu.memory_space<vmem>>, vector<2x128xf32>
    tpu.vector_store %arg2[%c0_6, %c0_7], %33 {strides = array<i32>} : memref<2x128xf32, #tpu.memory_space<vmem>>, vector<2x128xf32>,
    return
  }
  func.func @transform_0(%arg0: i32) -> (i32, i32) {
    %c0_i32 = arith.constant 0 : i32
    %c0_i32_0 = arith.constant 0 : i32
    return %arg0, %c0_i32 : i32, i32
  }
  func.func @transform_1(%arg0: i32) -> (i32, i32) {
    %c0_i32 = arith.constant 0 : i32
    %c0_i32_0 = arith.constant 0 : i32
    return %arg0, %c0_i32 : i32, i32
  }
}

</mosaic_0001>

<llo_original>
// kernel: invariant_poly.1
$region0: #{invariant_poly.1}
  #allocation0 [shape = 'u32[]', space=smem, size = 0x4, offset = 0x4, fixed_abs, tag = 'smem constant byte address 0x4 - core index']
  #allocation1 [shape = 'u32[144,128]{1,0:T(1,128)}', space=vmem, size = 0x12000, scoped, tag = 'internal scratch']
  %s0 = inlined_call_operand.vmem [shape: f32[2,128], index: 0, kind: input, shape index: {}]
  %s1 = inlined_call_operand.vmem [shape: f32[2,128], index: 1, kind: output, shape index: {}]
  %s2 = sld [smem:[#allocation0]]
  $region14: #{invariant_poly.1} parent=0
    _
  %s4 = ssub.s32 1, %s2
  %s5 = scalar_select 0, %s4, %s2
  // Predicated region
  $region2: #{invariant_poly.1} parent=0 // pred_check
    _
  $region3: #{invariant_poly.1} parent=0 // pred_check_branch
    %7 = sbr.rel (0) target = $region5
  $region4: #{invariant_poly.1} parent=0 // pred_region
    _
  $region5: #{invariant_poly.1} parent=0 // pred_fallthru
    _
  %v8 = vld [vmem:[%s0] sm:$0x3]
  %v9 = vmul.f32 %v8, %v8
  %10 = vrot.lane.b32.xlu0 %v9, 126
  %v11 = vpop.permute.xlu0 %10
  %v12 = vadd.f32 %v9, %v11
  %13 = vrot.lane.b32.xlu0 %v8, 127
  %v14 = vpop.permute.xlu0 %13
  %v15 = vmul.f32 %v8, %v14
  %16 = vrot.lane.b32.xlu0 %v15, 2
  %v17 = vpop.permute.xlu0 %16
  %v18 = vadd.f32 %v17, %v15
  %19 = vrot.lane.b32.xlu0 %v8, 3
  %v20 = vpop.permute.xlu0 %19
  %v21 = vmul.f32 %v20, %v8
  %v22 = vsub.f32 %v21, %v17
  %v23 = vlaneseq
  %v24 = vand.u32 %v23, 127
  %vm25 = vcmp.lt.s32.totalorder %v24, 0
  %v26 = vsub.s32 0, %v24
  %v27 = vsel %vm25, %v26, %v24
  %v28 = vshrl.u32 %v27, 2
  %v29 = vand.u32 %v27, 3
  %v30 = vsub.s32 0, %v29
  %v31 = vsel %vm25, %v30, %v29
  %vm32 = vcmp.ne.s32.totalorder %v31, 0
  %vm33 = vcmp.lt.s32.totalorder %v31, 0
  %vm34 = vmand %vm33, %vm32
  %v35 = vadd.s32 %v31, 4
  %v36 = vsel %vm34, %v35, %v31
  %vm37 = vcmp.le.s32.totalorder %v36, 1
  %vm38 = vcmp.eq.s32.totalorder %v36, 2
  %v39 = vsel %vm38, %v18, %v22
  %v40 = vsel %vm37, %v12, %v39
  %41 = vst [vmem:[%s1] sm:$0x3] %v40
  // Predicated region
  $region6: #{invariant_poly.1} parent=0 // pred_check
    _
  $region7: #{invariant_poly.1} parent=0 // pred_check_branch
    %43 = sbr.rel (0) target = $region9
  $region8: #{invariant_poly.1} parent=0 // pred_region
    _
  $region9: #{invariant_poly.1} parent=0 // pred_fallthru
    _
  // Predicated region
  $region10: #{invariant_poly.1} parent=0 // pred_check
    _
  $region11: #{invariant_poly.1} parent=0 // pred_check_branch
    %45 = sbr.rel (0) target = $region13
  $region12: #{invariant_poly.1} parent=0 // pred_region
    _
  $region13: #{invariant_poly.1} parent=0 // pred_fallthru
    _

</llo_original>
